<compile_context>
chip_gen: v7x
topology: tpu7x:2x2x1
jax: 0.10.0
libtpu: 0.0.40
codegen_flags: <defaults>
</compile_context>

<pallas_src>
import math

import jax
import jax.numpy as jnp
from jax.experimental import pallas as pl
from jax.experimental.pallas import tpu as pltpu


def _ceil_div(a, b):
    return -(-a // b)


def _round_up(a, b):
    return _ceil_div(a, b) * b


def _conv_gemm_kernel(x_ref, w_ref, b_ref, o_ref):
    # x: (rows, k*Din_p) bf16   w: (k*Din_p, k*Cout_p) bf16   b: (1, k*Cout_p) f32
    acc = jnp.dot(x_ref[...], w_ref[...], preferred_element_type=jnp.float32)
    o_ref[...] = (acc + b_ref[...]).astype(o_ref.dtype)


def conv_layer_forward(x, w, b, *, stride=1, pad=0):
    """JAX/Pallas equivalent of ConvLayer.forward -> (conv(x), {})."""
    B, C_in, H, W = x.shape
    C_out, C_in_w, KH, KW = w.shape
    assert C_in_w == C_in
    H_out = (H + 2 * pad - KH) // stride + 1
    W_out = (W + 2 * pad - KW) // stride + 1

    Din = KH * KW * C_in
    M = B * H_out * W_out
    out_dtype = x.dtype
    out_bytes = jnp.dtype(out_dtype).itemsize

    # ---- generation-aware VMEM budget --------------------------------------
    try:
        vmem_cap = int(pltpu.get_tpu_info().vmem_capacity_bytes)
    except Exception:
        vmem_cap = 64 * 2**20                 # conservative (v7x-sized) fallback
    budget = min((vmem_cap * 3) // 4, 100 * 2**20)   # ~48 MiB v7x, ~96 MiB v5e/v6e

    # ---- lane-dense row grouping: k rows share one >=128-lane output slab ---
    k = 128 // math.gcd(C_out, 128)           # smallest k with (k*C_out) % 128 == 0
    C_out_p = C_out
    if k > 1:
        unit_try = 128 // math.gcd(k, 128)
        din_try = _round_up(Din, unit_try)
        if 2 * (k * din_try) * (k * C_out) > min(8 * 2**20, budget // 8):
            k = 1                             # block-diag weight too big -> pad C_out
    if k == 1 and C_out % 128 != 0:
        C_out_p = _round_up(C_out, 128)

    # pad contraction so k*Din_p is a multiple of 128 (full-lane loads)
    unit = 128 // math.gcd(k, 128)
    Din_p = _round_up(Din, unit)
    if Din_p > 2 * Din:                       # don't inflate tiny contractions
        Din_p = Din

    # ---- row-tile sizing from the VMEM budget -------------------------------
    x_row_b = 2 * k * Din_p                   # bf16 patch bytes per grouped row
    o_row_b = out_bytes * k * C_out_p
    w_bytes = 2 * (k * Din_p) * (k * C_out_p)
    b_bytes = 4 * k * C_out_p
    # 2x double-buffered x/out blocks + double-buffered resident weights + slack
    avail = budget - 2 * (w_bytes + b_bytes) - (2 << 20)
    rows_fit = max(8, (avail // (2 * (x_row_b + o_row_b))) // 8 * 8)
    # aim for a multi-MiB input block, and >=256 rows so the MXU M dim is full
    rows_target = max(256, (4 * 2**20) // x_row_b) // 8 * 8
    rows_per_blk = max(8, min(rows_fit, rows_target))

    total_rows = _ceil_div(M, k)              # grouped rows in the problem
    quarter = _round_up(_ceil_div(total_rows, 4), 8)
    if quarter >= 512:
        # large problem: keep >=4 grid steps (>=2 per v7x TensorCore) so the
        # BlockSpec pipeline can prefetch the next block behind the matmul
        rows_per_blk = min(rows_per_blk, quarter)
    else:
        rows_per_blk = min(rows_per_blk, _round_up(total_rows, 8))
    # TODO(synk): if a single weight block ever exceeds the VMEM budget, a
    # contraction-axis grid with a f32 accumulator would be needed here.

    rows_padded = _round_up(total_rows, rows_per_blk)
    M_pad = rows_padded * k
    grid = (rows_padded // rows_per_blk,)

    # ---- glue: channels-last (bf16), zero-pad, im2col via shifted slices ----
    # TODO(synk): overlapping strided conv windows have no single-BlockSpec
    # expression, so patch extraction stays plain-JAX glue outside the kernel
    # (done in bf16 so the amplified patch stream through HBM is halved).
    x_cl = jnp.transpose(x, (0, 2, 3, 1)).astype(jnp.bfloat16)
    if pad > 0:
        x_cl = jnp.pad(x_cl, ((0, 0), (pad, pad), (pad, pad), (0, 0)))
    patches = []
    for kh in range(KH):
        for kw in range(KW):
            patches.append(
                x_cl[:, kh: kh + (H_out - 1) * stride + 1: stride,
                        kw: kw + (W_out - 1) * stride + 1: stride, :])
    xp = jnp.concatenate(patches, axis=-1) if len(patches) > 1 else patches[0]
    x2d = xp.reshape(M, Din)
    x2d = jnp.pad(x2d, ((0, M_pad - M), (0, Din_p - Din)))
    x_ld = x2d.reshape(rows_padded, k * Din_p)     # free row-major regrouping

    # weights as (Din, C_out); row index = (kh*KW + kw)*C_in + c (matches xp)
    w2d = jnp.transpose(w, (2, 3, 1, 0)).reshape(Din, C_out).astype(jnp.float32)
    w2d = jnp.pad(w2d, ((0, Din_p - Din), (0, C_out_p - C_out)))
    w_ld = jnp.kron(jnp.eye(k, dtype=w2d.dtype), w2d).astype(jnp.bfloat16)
    b_p = jnp.pad(b.astype(jnp.float32), (0, C_out_p - C_out))
    b_ld = jnp.tile(b_p.reshape(1, C_out_p), (1, k))

    cost = pl.CostEstimate(
        flops=2 * M * Din * C_out,
        transcendentals=0,
        bytes_accessed=(2 * M_pad * Din_p            # bf16 patches
                        + 2 * w_ld.size              # bf16 weights
                        + out_bytes * M_pad * C_out_p),
    )

    const = lambda i: (0, 0)
    out_ld = pl.pallas_call(
        _conv_gemm_kernel,
        out_shape=jax.ShapeDtypeStruct((rows_padded, k * C_out_p), out_dtype),
        grid_spec=pltpu.PrefetchScalarGridSpec(
            num_scalar_prefetch=0,
            grid=grid,
            in_specs=[
                pl.BlockSpec((rows_per_blk, k * Din_p), lambda i: (i, 0)),  # patches
                pl.BlockSpec((k * Din_p, k * C_out_p), const),              # block-diag W
                pl.BlockSpec((1, k * C_out_p), const),                      # bias
            ],
            out_specs=pl.BlockSpec((rows_per_blk, k * C_out_p), lambda i: (i, 0)),
        ),
        compiler_params=pltpu.CompilerParams(
            dimension_semantics=("parallel",),
            vmem_limit_bytes=int(budget),
        ),
        cost_estimate=cost,
    )(x_ld, w_ld, b_ld)

    out2d = out_ld.reshape(M_pad, C_out_p)[:M, :C_out]
    # NCHW kept for nn.Conv2d output parity; drop this transpose if the
    # consumer can take NHWC directly (saves one output HBM round trip).
    y = out2d.reshape(B, H_out, W_out, C_out).transpose(0, 3, 1, 2)
    return y, {}


if __name__ == "__main__":
    key = jax.random.PRNGKey(0)

    # small shapes consistent with the module: x (B, C_in, H, W)
    B, C_in, H, W = 2, 4, 16, 16
    C_out, K, stride, pad = 8, 3, 1, 1

    key, kx, kw, kb = jax.random.split(key, 4)
    x = jax.random.normal(kx, (B, C_in, H, W), jnp.float32)
    bound = 1.0 / (C_in * K * K) ** 0.5      # nn.Conv2d default init bounds
    w = jax.random.uniform(kw, (C_out, C_in, K, K), jnp.float32,
                           minval=-bound, maxval=bound)
    b = jax.random.uniform(kb, (C_out,), jnp.float32,
                           minval=-bound, maxval=bound)

    fwd = jax.jit(lambda x_, w_, b_: conv_layer_forward(x_, w_, b_,
                                                        stride=stride, pad=pad))
    y, extra = fwd(x, w, b)
    y = jax.block_until_ready(y)

    ref = jax.lax.conv_general_dilated(
        x, w, window_strides=(stride, stride),
        padding=[(pad, pad), (pad, pad)],
        dimension_numbers=("NCHW", "OIHW", "NCHW"),
        precision=jax.lax.Precision.HIGHEST,
    ) + b.reshape(1, C_out, 1, 1)

    H_out = (H + 2 * pad - K) // stride + 1
    W_out = (W + 2 * pad - K) // stride + 1
    assert y.shape == (B, C_out, H_out, W_out), y.shape
    assert extra == {}
    err = float(jnp.max(jnp.abs(y - ref)))
    # bf16 MXU inputs with f32 accumulation -> looser tolerance than pure f32
    assert err < 5e-2, err

    print("KERNEL_OK")
</pallas_src>

<mosaic_0001>
module attributes {stable_mosaic.version = 11 : i64} {
  func.func @_conv_gemm_kernel(%arg0: i32, %arg1: memref<32x640xbf16, #tpu.memory_space<vmem>>, %arg2: memref<640x128xbf16, #tpu.memory_space<vmem>>, %arg3: memref<1x128xf32, #tpu.memory_space<vmem>>, %arg4: memref<32x128xf32, #tpu.memory_space<vmem>>) attributes {dimension_semantics = [#tpu.dimension_semantics<parallel>], iteration_bounds = array<i64: 1>, scalar_prefetch = 0 : i64, scratch_operands = 0 : i64, tpu.core_type = #tpu.core_type<tc>, window_params = [{transform_indices = @transform_0, window_bounds = array<i64: 32, 640>}, {pipeline_mode = #tpu.pipeline_mode<synchronous>, transform_indices = @transform_1, window_bounds = array<i64: 640, 128>}, {pipeline_mode = #tpu.pipeline_mode<synchronous>, transform_indices = @transform_2, window_bounds = array<i64: 1, 128>}, {transform_indices = @transform_3, window_bounds = array<i64: 32, 128>}]} {
    %c0 = arith.constant 0 : index
    %c0_0 = arith.constant 0 : index
    %0 = vector.load %arg1[%c0, %c0_0] : memref<32x640xbf16, #tpu.memory_space<vmem>>, vector<32x640xbf16>
    %c0_1 = arith.constant 0 : index
    %c0_2 = arith.constant 0 : index
    %1 = vector.load %arg2[%c0_1, %c0_2] : memref<640x128xbf16, #tpu.memory_space<vmem>>, vector<640x128xbf16>
    %cst = arith.constant dense<0.000000e+00> : vector<32x128xf32>
    %2 = tpu.matmul %0, %1, %cst {dimension_numbers = #tpu.dot_dimension_numbers<[1], [0], [0], [1], [0, 0, 1, 1], [], []>} : vector<32x640xbf16>, vector<640x128xbf16>, vector<32x128xf32> -> vector<32x128xf32>
    %c0_3 = arith.constant 0 : index
    %c0_4 = arith.constant 0 : index
    %3 = vector.load %arg3[%c0_3, %c0_4] : memref<1x128xf32, #tpu.memory_space<vmem>>, vector<1x128xf32>
    %4 = vector.broadcast %3 : vector<1x128xf32> to vector<32x128xf32>
    %5 = arith.addf %2, %4 : vector<32x128xf32>
    %c0_5 = arith.constant 0 : index
    %c0_6 = arith.constant 0 : index
    %6 = vector.load %arg4[%c0_5, %c0_6] : memref<32x128xf32, #tpu.memory_space<vmem>>, vector<32x128xf32>
    tpu.vector_store %arg4[%c0_5, %c0_6], %5 {strides = array<i32>} : memref<32x128xf32, #tpu.memory_space<vmem>>, vector<32x128xf32>,
    return
  }
  func.func @transform_0(%arg0: i32) -> (i32, i32) {
    %c0_i32 = arith.constant 0 : i32
    %c0_i32_0 = arith.constant 0 : i32
    return %arg0, %c0_i32 : i32, i32
  }
  func.func @transform_1(%arg0: i32) -> (i32, i32) {
    %c0_i32 = arith.constant 0 : i32
    %c0_i32_0 = arith.constant 0 : i32
    %c0_i32_1 = arith.constant 0 : i32
    return %c0_i32, %c0_i32_0 : i32, i32
  }
  func.func @transform_2(%arg0: i32) -> (i32, i32) {
    %c0_i32 = arith.constant 0 : i32
    %c0_i32_0 = arith.constant 0 : i32
    %c0_i32_1 = arith.constant 0 : i32
    return %c0_i32, %c0_i32_0 : i32, i32
  }
  func.func @transform_3(%arg0: i32) -> (i32, i32) {
    %c0_i32 = arith.constant 0 : i32
    %c0_i32_0 = arith.constant 0 : i32
    return %arg0, %c0_i32 : i32, i32
  }
}

</mosaic_0001>

<llo_original>
// kernel: _lambda_.1
$region0: #{_lambda_.1}
  #allocation0 [shape = 'u32[]', space=smem, size = 0x4, offset = 0x4, fixed_abs, tag = 'smem constant byte address 0x4 - core index']
  #allocation1 [shape = 'u32[144,128]{1,0:T(1,128)}', space=vmem, size = 0x12000, scoped, tag = 'internal scratch']
  %s0 = inlined_call_operand.vmem [shape: bf16[32,640], index: 0, kind: input, shape index: {}]
  %s1 = inlined_call_operand.vmem [shape: bf16[640,128], index: 1, kind: input, shape index: {}]
  %s2 = inlined_call_operand.vmem [shape: f32[1,128], index: 2, kind: input, shape index: {}]
  %s3 = inlined_call_operand.vmem [shape: f32[32,128], index: 3, kind: output, shape index: {}]
  %s4 = sld [smem:[#allocation0]]
  $region22: #{_lambda_.1} parent=0
    _
  %s6 = ssub.s32 1, %s4
  %s7 = scalar_select 0, %s6, %s4
  // Predicated region
  $region2: #{_lambda_.1} parent=0 // pred_check
    _
  $region3: #{_lambda_.1} parent=0 // pred_check_branch
    %9 = sbr.rel (0) target = $region5
  $region4: #{_lambda_.1} parent=0 // pred_region
    _
  $region5: #{_lambda_.1} parent=0 // pred_fallthru
    _
  // Predicated region
  $region6: #{_lambda_.1} parent=0 // pred_check
    _
  $region7: #{_lambda_.1} parent=0 // pred_check_branch
    %11 = sbr.rel (0) target = $region9
  $region8: #{_lambda_.1} parent=0 // pred_region
    _
  $region9: #{_lambda_.1} parent=0 // pred_fallthru
    _
  // Predicated region
  $region10: #{_lambda_.1} parent=0 // pred_check
    _
  $region11: #{_lambda_.1} parent=0 // pred_check_branch
    %13 = sbr.rel (0) target = $region13
  $region12: #{_lambda_.1} parent=0 // pred_region
    _
  $region13: #{_lambda_.1} parent=0 // pred_fallthru
    _
  %v15 = vld [vmem:[%s0] sm:$0xff]
  %v16 = vld [vmem:[%s0 + $0x8] sm:$0xff]
  %v17 = vld [vmem:[%s0 + $0x10] sm:$0xf]
  %v18 = vld [vmem:[%s0 + $0x14] sm:$0xff]
  %v19 = vld [vmem:[%s0 + $0x1c] sm:$0xff]
  %v20 = vld [vmem:[%s0 + $0x24] sm:$0xf]
  %v21 = vld [vmem:[%s0 + $0x28] sm:$0xff]
  %v22 = vld [vmem:[%s0 + $0x30] sm:$0xff]
  %v23 = vld [vmem:[%s0 + $0x38] sm:$0xf]
  %v24 = vld [vmem:[%s0 + $0x3c] sm:$0xff]
  %v25 = vld [vmem:[%s0 + $0x44] sm:$0xff]
  %v26 = vld [vmem:[%s0 + $0x4c] sm:$0xf]
  %v27 = vld [vmem:[%s1] sm:$0xf]
  %v28 = vld [vmem:[%s1 + $0x4] sm:$0xf]
  %v29 = vld [vmem:[%s1 + $0x8] sm:$0xf]
  %v30 = vld [vmem:[%s1 + $0xc] sm:$0xf]
  %v31 = vld [vmem:[%s1 + $0x10] sm:$0xf]
  %v32 = vld [vmem:[%s1 + $0x14] sm:$0xf]
  %v33 = vld [vmem:[%s1 + $0x18] sm:$0xf]
  %v34 = vld [vmem:[%s1 + $0x1c] sm:$0xf]
  %v35 = vld [vmem:[%s1 + $0x20] sm:$0xf]
  %v36 = vld [vmem:[%s1 + $0x24] sm:$0xf]
  %v37 = vld [vmem:[%s1 + $0x28] sm:$0xf]
  %v38 = vld [vmem:[%s1 + $0x2c] sm:$0xf]
  %v39 = vld [vmem:[%s1 + $0x30] sm:$0xf]
  %v40 = vld [vmem:[%s1 + $0x34] sm:$0xf]
  %v41 = vld [vmem:[%s1 + $0x38] sm:$0xf]
  %v42 = vld [vmem:[%s1 + $0x3c] sm:$0xf]
  %v43 = vld [vmem:[%s1 + $0x40] sm:$0xf]
  %v44 = vld [vmem:[%s1 + $0x44] sm:$0xf]
  %v45 = vld [vmem:[%s1 + $0x48] sm:$0xf]
  %v46 = vld [vmem:[%s1 + $0x4c] sm:$0xf]
  %v47 = vld [vmem:[%s1 + $0x50] sm:$0xf]
  %v48 = vld [vmem:[%s1 + $0x54] sm:$0xf]
  %v49 = vld [vmem:[%s1 + $0x58] sm:$0xf]
  %v50 = vld [vmem:[%s1 + $0x5c] sm:$0xf]
  %v51 = vld [vmem:[%s1 + $0x60] sm:$0xf]
  %v52 = vld [vmem:[%s1 + $0x64] sm:$0xf]
  %v53 = vld [vmem:[%s1 + $0x68] sm:$0xf]
  %v54 = vld [vmem:[%s1 + $0x6c] sm:$0xf]
  %v55 = vld [vmem:[%s1 + $0x70] sm:$0xf]
  %v56 = vld [vmem:[%s1 + $0x74] sm:$0xf]
  %v57 = vld [vmem:[%s1 + $0x78] sm:$0xf]
  %v58 = vld [vmem:[%s1 + $0x7c] sm:$0xf]
  %v59 = vld [vmem:[%s1 + $0x80] sm:$0xf]
  %v60 = vld [vmem:[%s1 + $0x84] sm:$0xf]
  %v61 = vld [vmem:[%s1 + $0x88] sm:$0xf]
  %v62 = vld [vmem:[%s1 + $0x8c] sm:$0xf]
  %v63 = vld [vmem:[%s1 + $0x90] sm:$0xf]
  %v64 = vld [vmem:[%s1 + $0x94] sm:$0xf]
  %v65 = vld [vmem:[%s1 + $0x98] sm:$0xf]
  %v66 = vld [vmem:[%s1 + $0x9c] sm:$0xf]
  %v67 = vld [vmem:[%s1 + $0xa0] sm:$0xf]
  %v68 = vld [vmem:[%s1 + $0xa4] sm:$0xf]
  %v69 = vld [vmem:[%s1 + $0xa8] sm:$0xf]
  %v70 = vld [vmem:[%s1 + $0xac] sm:$0xf]
  %v71 = vld [vmem:[%s1 + $0xb0] sm:$0xf]
  %v72 = vld [vmem:[%s1 + $0xb4] sm:$0xf]
  %v73 = vld [vmem:[%s1 + $0xb8] sm:$0xf]
  %v74 = vld [vmem:[%s1 + $0xbc] sm:$0xf]
  %v75 = vld [vmem:[%s1 + $0xc0] sm:$0xf]
  %v76 = vld [vmem:[%s1 + $0xc4] sm:$0xf]
  %v77 = vld [vmem:[%s1 + $0xc8] sm:$0xf]
  %v78 = vld [vmem:[%s1 + $0xcc] sm:$0xf]
  %v79 = vld [vmem:[%s1 + $0xd0] sm:$0xf]
  %v80 = vld [vmem:[%s1 + $0xd4] sm:$0xf]
  %v81 = vld [vmem:[%s1 + $0xd8] sm:$0xf]
  %v82 = vld [vmem:[%s1 + $0xdc] sm:$0xf]
  %v83 = vld [vmem:[%s1 + $0xe0] sm:$0xf]
  %v84 = vld [vmem:[%s1 + $0xe4] sm:$0xf]
  %v85 = vld [vmem:[%s1 + $0xe8] sm:$0xf]
  %v86 = vld [vmem:[%s1 + $0xec] sm:$0xf]
  %v87 = vld [vmem:[%s1 + $0xf0] sm:$0xf]
  %v88 = vld [vmem:[%s1 + $0xf4] sm:$0xf]
  %v89 = vld [vmem:[%s1 + $0xf8] sm:$0xf]
  %v90 = vld [vmem:[%s1 + $0xfc] sm:$0xf]
  %v91 = vld [vmem:[%s1 + $0x100] sm:$0xf]
  %v92 = vld [vmem:[%s1 + $0x104] sm:$0xf]
  %v93 = vld [vmem:[%s1 + $0x108] sm:$0xf]
  %v94 = vld [vmem:[%s1 + $0x10c] sm:$0xf]
  %v95 = vld [vmem:[%s1 + $0x110] sm:$0xf]
  %v96 = vld [vmem:[%s1 + $0x114] sm:$0xf]
  %v97 = vld [vmem:[%s1 + $0x118] sm:$0xf]
  %v98 = vld [vmem:[%s1 + $0x11c] sm:$0xf]
  %v99 = vld [vmem:[%s1 + $0x120] sm:$0xf]
  %v100 = vld [vmem:[%s1 + $0x124] sm:$0xf]
  %v101 = vld [vmem:[%s1 + $0x128] sm:$0xf]
  %v102 = vld [vmem:[%s1 + $0x12c] sm:$0xf]
  %v103 = vld [vmem:[%s1 + $0x130] sm:$0xf]
  %v104 = vld [vmem:[%s1 + $0x134] sm:$0xf]
  %v105 = vld [vmem:[%s1 + $0x138] sm:$0xf]
  %v106 = vld [vmem:[%s1 + $0x13c] sm:$0xf]
  %v107 = vld [vmem:[%s2] sm:$0x1]
  %v109 = vlaneseq
  %v110 = vshrl.u32 %v109, 7
  %v111 = vsub.s32 0, %v110
  %v112 = vrot.slane %v107, %v111
  %v126 = vunpack.c.l.b16 %v15
  %v127 = vunpack.c.h.b16 %v15
  %v128 = vunpack.c.l.b16 %v16
  %v129 = vunpack.c.h.b16 %v16
  %v130 = vunpack.c.l.b16 %v17
  %v131 = vunpack.c.l.b16 %v18
  %v132 = vunpack.c.h.b16 %v18
  %v133 = vunpack.c.l.b16 %v19
  %v134 = vunpack.c.h.b16 %v19
  %v135 = vunpack.c.l.b16 %v20
  %v136 = vunpack.c.l.b16 %v21
  %v137 = vunpack.c.h.b16 %v21
  %v138 = vunpack.c.l.b16 %v22
  %v139 = vunpack.c.h.b16 %v22
  %v140 = vunpack.c.l.b16 %v23
  %v141 = vunpack.c.l.b16 %v24
  %v142 = vunpack.c.h.b16 %v24
  %v143 = vunpack.c.l.b16 %v25
  %v144 = vunpack.c.h.b16 %v25
  %v145 = vunpack.c.l.b16 %v26
  %v146 = vpack.c.b16 %v131, %v126
  %v147 = vpack.c.b16 %v132, %v127
  %v148 = vpack.c.b16 %v133, %v128
  %v149 = vpack.c.b16 %v134, %v129
  %v150 = vpack.c.b16 %v135, %v130
  %v151 = vpack.c.b16 %v141, %v136
  %v152 = vpack.c.b16 %v142, %v137
  %v153 = vpack.c.b16 %v143, %v138
  %v154 = vpack.c.b16 %v144, %v139
  %v155 = vpack.c.b16 %v145, %v140
  %v246 = vunpack.c.l.b16 %v27
  %v247 = vunpack.c.l.b16 %v28
  %v248 = vunpack.c.l.b16 %v29
  %v249 = vunpack.c.l.b16 %v30
  %v250 = vunpack.c.l.b16 %v31
  %v251 = vunpack.c.l.b16 %v32
  %v252 = vunpack.c.l.b16 %v33
  %v253 = vunpack.c.l.b16 %v34
  %v254 = vunpack.c.l.b16 %v35
  %v255 = vunpack.c.l.b16 %v36
  %v256 = vunpack.c.l.b16 %v37
  %v257 = vunpack.c.l.b16 %v38
  %v258 = vunpack.c.l.b16 %v39
  %v259 = vunpack.c.l.b16 %v40
  %v260 = vunpack.c.l.b16 %v41
  %v261 = vunpack.c.l.b16 %v42
  %v262 = vunpack.c.l.b16 %v43
  %v263 = vunpack.c.l.b16 %v44
  %v264 = vunpack.c.l.b16 %v45
  %v265 = vunpack.c.l.b16 %v46
  %v266 = vunpack.c.l.b16 %v47
  %v267 = vunpack.c.l.b16 %v48
  %v268 = vunpack.c.l.b16 %v49
  %v269 = vunpack.c.l.b16 %v50
  %v270 = vunpack.c.l.b16 %v51
  %v271 = vunpack.c.l.b16 %v52
  %v272 = vunpack.c.l.b16 %v53
  %v273 = vunpack.c.l.b16 %v54
  %v274 = vunpack.c.l.b16 %v55
  %v275 = vunpack.c.l.b16 %v56
  %v276 = vunpack.c.l.b16 %v57
  %v277 = vunpack.c.l.b16 %v58
  %v278 = vunpack.c.l.b16 %v59
  %v279 = vunpack.c.l.b16 %v60
  %v280 = vunpack.c.l.b16 %v61
  %v281 = vunpack.c.l.b16 %v62
  %v282 = vunpack.c.l.b16 %v63
  %v283 = vunpack.c.l.b16 %v64
  %v284 = vunpack.c.l.b16 %v65
  %v285 = vunpack.c.l.b16 %v66
  %v286 = vunpack.c.l.b16 %v67
  %v287 = vunpack.c.l.b16 %v68
  %v288 = vunpack.c.l.b16 %v69
  %v289 = vunpack.c.l.b16 %v70
  %v290 = vunpack.c.l.b16 %v71
  %v291 = vunpack.c.l.b16 %v72
  %v292 = vunpack.c.l.b16 %v73
  %v293 = vunpack.c.l.b16 %v74
  %v294 = vunpack.c.l.b16 %v75
  %v295 = vunpack.c.l.b16 %v76
  %v296 = vunpack.c.l.b16 %v77
  %v297 = vunpack.c.l.b16 %v78
  %v298 = vunpack.c.l.b16 %v79
  %v299 = vunpack.c.l.b16 %v80
  %v300 = vunpack.c.l.b16 %v81
  %v301 = vunpack.c.l.b16 %v82
  %v302 = vunpack.c.l.b16 %v83
  %v303 = vunpack.c.l.b16 %v84
  %v304 = vunpack.c.l.b16 %v85
  %v305 = vunpack.c.l.b16 %v86
  %v306 = vunpack.c.l.b16 %v87
  %v307 = vunpack.c.l.b16 %v88
  %v308 = vunpack.c.l.b16 %v89
  %v309 = vunpack.c.l.b16 %v90
  %v310 = vunpack.c.l.b16 %v91
  %v311 = vunpack.c.l.b16 %v92
  %v312 = vunpack.c.l.b16 %v93
  %v313 = vunpack.c.l.b16 %v94
  %v314 = vunpack.c.l.b16 %v95
  %v315 = vunpack.c.l.b16 %v96
  %v316 = vunpack.c.l.b16 %v97
  %v317 = vunpack.c.l.b16 %v98
  %v318 = vunpack.c.l.b16 %v99
  %v319 = vunpack.c.l.b16 %v100
  %v320 = vunpack.c.l.b16 %v101
  %v321 = vunpack.c.l.b16 %v102
  %v322 = vunpack.c.l.b16 %v103
  %v323 = vunpack.c.l.b16 %v104
  %v324 = vunpack.c.l.b16 %v105
  %v325 = vunpack.c.l.b16 %v106
  %v326 = vpack.c.b16 %v247, %v246
  %v327 = vpack.c.b16 %v249, %v248
  %v328 = vpack.c.b16 %v251, %v250
  %v329 = vpack.c.b16 %v253, %v252
  %v330 = vpack.c.b16 %v255, %v254
  %v331 = vpack.c.b16 %v257, %v256
  %v332 = vpack.c.b16 %v259, %v258
  %v333 = vpack.c.b16 %v261, %v260
  %v334 = vpack.c.b16 %v263, %v262
  %v335 = vpack.c.b16 %v265, %v264
  %v336 = vpack.c.b16 %v267, %v266
  %v337 = vpack.c.b16 %v269, %v268
  %v338 = vpack.c.b16 %v271, %v270
  %v339 = vpack.c.b16 %v273, %v272
  %v340 = vpack.c.b16 %v275, %v274
  %v341 = vpack.c.b16 %v277, %v276
  %v342 = vpack.c.b16 %v279, %v278
  %v343 = vpack.c.b16 %v281, %v280
  %v344 = vpack.c.b16 %v283, %v282
  %v345 = vpack.c.b16 %v285, %v284
  %v346 = vpack.c.b16 %v287, %v286
  %v347 = vpack.c.b16 %v289, %v288
  %v348 = vpack.c.b16 %v291, %v290
  %v349 = vpack.c.b16 %v293, %v292
  %v350 = vpack.c.b16 %v295, %v294
  %v351 = vpack.c.b16 %v297, %v296
  %v352 = vpack.c.b16 %v299, %v298
  %v353 = vpack.c.b16 %v301, %v300
  %v354 = vpack.c.b16 %v303, %v302
  %v355 = vpack.c.b16 %v305, %v304
  %v356 = vpack.c.b16 %v307, %v306
  %v357 = vpack.c.b16 %v309, %v308
  %v358 = vpack.c.b16 %v311, %v310
  %v359 = vpack.c.b16 %v313, %v312
  %v360 = vpack.c.b16 %v315, %v314
  %v361 = vpack.c.b16 %v317, %v316
  %v362 = vpack.c.b16 %v319, %v318
  %v363 = vpack.c.b16 %v321, %v320
  %v364 = vpack.c.b16 %v323, %v322
  %v365 = vpack.c.b16 %v325, %v324
  %406 = vmatprep.subr.bf16.mxu0 0
  %407 = vmatpush1.bf16.msra.mxu0 %v326
  %408 = vmatprep.subr.bf16.mxu0 0
  %409 = vmatpush1.bf16.msra.mxu0 %v327
  %410 = vmatprep.subr.bf16.mxu0 0
  %411 = vmatpush1.bf16.msra.mxu0 %v328
  %412 = vmatprep.subr.bf16.mxu0 0
  %413 = vmatpush1.bf16.msra.mxu0 %v329
  %414 = vmatprep.subr.bf16.mxu0 0
  %415 = vmatpush1.bf16.msra.mxu0 %v330
  %416 = vmatprep.subr.bf16.mxu0 0
  %417 = vmatpush1.bf16.msra.mxu0 %v331
  %418 = vmatprep.subr.bf16.mxu0 0
  %419 = vmatpush1.bf16.msra.mxu0 %v332
  %420 = vmatprep.subr.bf16.mxu0 0
  %421 = vmatpush1.bf16.msra.mxu0 %v333
  %422 = vmatprep.subr.bf16.mxu0 0
  %423 = vmatpush1.bf16.msra.mxu0 %v334
  %424 = vmatprep.subr.bf16.mxu0 0
  %425 = vmatpush1.bf16.msra.mxu0 %v335
  %426 = vmatprep.subr.bf16.mxu0 0
  %427 = vmatpush1.bf16.msra.mxu0 %v336
  %428 = vmatprep.subr.bf16.mxu0 0
  %429 = vmatpush1.bf16.msra.mxu0 %v337
  %430 = vmatprep.subr.bf16.mxu0 0
  %431 = vmatpush1.bf16.msra.mxu0 %v338
  %432 = vmatprep.subr.bf16.mxu0 0
  %433 = vmatpush1.bf16.msra.mxu0 %v339
  %434 = vmatprep.subr.bf16.mxu0 0
  %435 = vmatpush1.bf16.msra.mxu0 %v340
  %436 = vmatprep.subr.bf16.mxu0 0
  %437 = vmatpush1.bf16.msra.mxu0 %v341
  %438 = vmatprep.mubr.bf16.mxu0 %v147
  %439 = vmatmul.mubr.bf16.gmra.mrb[0].mxu0 %v146
  %v440 = vpop.f32.mrb[0].mxu0
  %v441 = vadd.f32 %v112, %v440
  %v442 = vpop.f32.mrb[0].mxu0
  %v443 = vpop.f32.mrb[0].mxu0
  %v444 = vadd.f32 %v112, %v443
  %v445 = vpop.f32.mrb[0].mxu0
  %446 = vmatprep.mubr.bf16.mxu0 %v152
  %447 = vmatmul.mubr.bf16.gmra.mrb[0].mxu0 %v151
  %v448 = vpop.f32.mrb[0].mxu0
  %v449 = vadd.f32 %v112, %v448
  %v450 = vpop.f32.mrb[0].mxu0
  %v451 = vpop.f32.mrb[0].mxu0
  %v452 = vadd.f32 %v112, %v451
  %v453 = vpop.f32.mrb[0].mxu0
  %454 = vdwg.mxu0
  %455 = vmatprep.subr.bf16.mxu0 0
  %456 = vmatpush1.bf16.msra.mxu0 %v342
  %457 = vmatprep.subr.bf16.mxu0 0
  %458 = vmatpush1.bf16.msra.mxu0 %v343
  %459 = vmatprep.subr.bf16.mxu0 0
  %460 = vmatpush1.bf16.msra.mxu0 %v344
  %461 = vmatprep.subr.bf16.mxu0 0
  %462 = vmatpush1.bf16.msra.mxu0 %v345
  %463 = vmatprep.subr.bf16.mxu0 0
  %464 = vmatpush1.bf16.msra.mxu0 %v346
  %465 = vmatprep.subr.bf16.mxu0 0
  %466 = vmatpush1.bf16.msra.mxu0 %v347
  %467 = vmatprep.subr.bf16.mxu0 0
  %468 = vmatpush1.bf16.msra.mxu0 %v348
  %469 = vmatprep.subr.bf16.mxu0 0
  %470 = vmatpush1.bf16.msra.mxu0 %v349
  %471 = vmatprep.subr.bf16.mxu0 0
  %472 = vmatpush1.bf16.msra.mxu0 %v350
  %473 = vmatprep.subr.bf16.mxu0 0
  %474 = vmatpush1.bf16.msra.mxu0 %v351
  %475 = vmatprep.subr.bf16.mxu0 0
  %476 = vmatpush1.bf16.msra.mxu0 %v352
  %477 = vmatprep.subr.bf16.mxu0 0
  %478 = vmatpush1.bf16.msra.mxu0 %v353
  %479 = vmatprep.subr.bf16.mxu0 0
  %480 = vmatpush1.bf16.msra.mxu0 %v354
  %481 = vmatprep.subr.bf16.mxu0 0
  %482 = vmatpush1.bf16.msra.mxu0 %v355
  %483 = vmatprep.subr.bf16.mxu0 0
  %484 = vmatpush1.bf16.msra.mxu0 %v356
  %485 = vmatprep.subr.bf16.mxu0 0
  %486 = vmatpush1.bf16.msra.mxu0 %v357
  %487 = vmatprep.mubr.bf16.mxu0 %v149
  %488 = vmatmul.mubr.bf16.gmra.mrb[0].mxu0 %v148
  %v489 = vpop.f32.mrb[0].mxu0
  %v490 = vadd.f32 %v441, %v489
  %v491 = vpop.f32.mrb[0].mxu0
  %v492 = vpop.f32.mrb[0].mxu0
  %v493 = vadd.f32 %v444, %v492
  %v494 = vpop.f32.mrb[0].mxu0
  %495 = vmatprep.mubr.bf16.mxu0 %v154
  %496 = vmatmul.mubr.bf16.gmra.mrb[0].mxu0 %v153
  %v497 = vpop.f32.mrb[0].mxu0
  %v498 = vadd.f32 %v449, %v497
  %v499 = vpop.f32.mrb[0].mxu0
  %v500 = vpop.f32.mrb[0].mxu0
  %v501 = vadd.f32 %v452, %v500
  %v502 = vpop.f32.mrb[0].mxu0
  %503 = vdwg.mxu0
  %504 = vmatprep.subr.bf16.mxu0 0
  %505 = vmatpush1.bf16.msra.mxu0 %v358
  %506 = vmatprep.subr.bf16.mxu0 0
  %507 = vmatpush1.bf16.msra.mxu0 %v359
  %508 = vmatprep.subr.bf16.mxu0 0
  %509 = vmatpush1.bf16.msra.mxu0 %v360
  %510 = vmatprep.subr.bf16.mxu0 0
  %511 = vmatpush1.bf16.msra.mxu0 %v361
  %512 = vmatprep.subr.bf16.mxu0 0
  %513 = vmatpush1.bf16.msra.mxu0 %v362
  %514 = vmatprep.subr.bf16.mxu0 0
  %515 = vmatpush1.bf16.msra.mxu0 %v363
  %516 = vmatprep.subr.bf16.mxu0 0
  %517 = vmatpush1.bf16.msra.mxu0 %v364
  %518 = vmatprep.subr.bf16.mxu0 0
  %519 = vmatpush1.bf16.msra.mxu0 %v365
  %520 = vmatprep.subr.bf16.mxu0 0
  %521 = vmatpush1.bf16.msra.mxu0 0
  %522 = vmatprep.subr.bf16.mxu0 0
  %523 = vmatpush1.bf16.msra.mxu0 0
  %524 = vmatprep.subr.bf16.mxu0 0
  %525 = vmatpush1.bf16.msra.mxu0 0
  %526 = vmatprep.subr.bf16.mxu0 0
  %527 = vmatpush1.bf16.msra.mxu0 0
  %528 = vmatprep.subr.bf16.mxu0 0
  %529 = vmatpush1.bf16.msra.mxu0 0
  %530 = vmatprep.subr.bf16.mxu0 0
  %531 = vmatpush1.bf16.msra.mxu0 0
  %532 = vmatprep.subr.bf16.mxu0 0
  %533 = vmatpush1.bf16.msra.mxu0 0
  %534 = vmatprep.subr.bf16.mxu0 0
  %535 = vmatpush1.bf16.msra.mxu0 0
  %536 = vmatprep.mubr.bf16.mxu0 0
  %537 = vmatmul.mubr.bf16.gmra.mrb[0].mxu0 %v150
  %v538 = vpop.f32.mrb[0].mxu0
  %v539 = vadd.f32 %v490, %v538
  %v540 = vpop.f32.mrb[0].mxu0
  %v541 = vpop.f32.mrb[0].mxu0
  %v542 = vadd.f32 %v493, %v541
  %v543 = vpop.f32.mrb[0].mxu0
  %544 = vmatprep.mubr.bf16.mxu0 0
  %545 = vmatmul.mubr.bf16.gmra.mrb[0].mxu0 %v155
  %v546 = vpop.f32.mrb[0].mxu0
  %v547 = vadd.f32 %v498, %v546
  %v548 = vpop.f32.mrb[0].mxu0
  %v549 = vpop.f32.mrb[0].mxu0
  %v550 = vadd.f32 %v501, %v549
  %v551 = vpop.f32.mrb[0].mxu0
  %552 = vdwg.mxu0
  %553 = vst [vmem:[%s3] sm:$0xff] %v539
  %554 = vst [vmem:[%s3 + $0x8] sm:$0xff] %v542
  %555 = vst [vmem:[%s3 + $0x10] sm:$0xff] %v547
  %556 = vst [vmem:[%s3 + $0x18] sm:$0xff] %v550
  // Predicated region
  $region14: #{_lambda_.1} parent=0 // pred_check
    _
  $region15: #{_lambda_.1} parent=0 // pred_check_branch
    %558 = sbr.rel (0) target = $region17
  $region16: #{_lambda_.1} parent=0 // pred_region
    _
  $region17: #{_lambda_.1} parent=0 // pred_fallthru
    _
  // Predicated region
  $region18: #{_lambda_.1} parent=0 // pred_check
    _
  $region19: #{_lambda_.1} parent=0 // pred_check_branch
    %560 = sbr.rel (0) target = $region21
  $region20: #{_lambda_.1} parent=0 // pred_region
    _
  $region21: #{_lambda_.1} parent=0 // pred_fallthru
    _

</llo_original>
